<compile_context>
chip_gen: v5e
topology: v5e:2x2
jax: 0.10.0
libtpu: 0.0.40
codegen_flags: <defaults>
</compile_context>

<pallas_src>
import math

import jax
import jax.numpy as jnp
import numpy as np
from jax.experimental import pallas as pl
from jax.experimental.pallas import tpu as pltpu

BN_EPS = 1e-5
LEAKY_SLOPE = 0.01
CONSTANT = 10.0          # BGConv_unit self-confidence logit (10 * torch.ones(1))
NEG_INF = -1e30          # padding logit -> exp() underflows to exactly 0


# ----------------------------------------------------------------------------
# helpers
# ----------------------------------------------------------------------------
def _round_up(n, m):
    return ((n + m - 1) // m) * m


def _tile_and_pad(n, max_tile):
    """Sublane-aligned tile <= max_tile plus the padded extent it divides."""
    tile = max_tile if n >= max_tile else _round_up(n, 8)
    return tile, _round_up(n, tile)


def _pad_rows(x, n_pad, value=0):
    pad = n_pad - x.shape[0]
    if pad == 0:
        return x
    return jnp.concatenate(
        [x, jnp.full((pad,) + x.shape[1:], value, x.dtype)], axis=0)


# ----------------------------------------------------------------------------
# Kernel 1: pair gather + concat + conv MLP (Linear -> LeakyReLU -> BN -> Linear)
# grid = (pair tiles,)   -- fully parallel, all weights + object_feats VMEM-resident
# ----------------------------------------------------------------------------
def pair_mlp_kernel(sub_ref, obj_ref, feats_ref, w1a_ref, w1b_ref, b1_ref,
                    scale_ref, shift_ref, w2_ref, b2_ref, out_ref):
    tp = sub_ref.shape[0]
    o_pad = feats_ref.shape[0]

    # One-hot gather of subject / object rows via MXU (exact for 0/1 weights).
    # TODO(synk): for very large O replace with a scalar-prefetched dynamic-row /
    # DMA gather; the dense one-hot costs O(TP*O*D) flops.
    col = jax.lax.broadcasted_iota(jnp.int32, (tp, o_pad), 1)
    sub_oh = (col == sub_ref[...]).astype(jnp.float32)          # (TP, O)
    obj_oh = (col == obj_ref[...]).astype(jnp.float32)
    feats = feats_ref[...]
    x_sub = jnp.dot(sub_oh, feats, preferred_element_type=jnp.float32)   # (TP, D)
    x_obj = jnp.dot(obj_oh, feats, preferred_element_type=jnp.float32)

    # cat([x_sub, x_obj], 1) @ W1^T  ==  x_sub @ W1a + x_obj @ W1b   (whole K in one dot)
    h = (jnp.dot(x_sub, w1a_ref[...], preferred_element_type=jnp.float32)
         + jnp.dot(x_obj, w1b_ref[...], preferred_element_type=jnp.float32)
         + b1_ref[...])
    h = jnp.where(h >= 0, h, LEAKY_SLOPE * h)                   # LeakyReLU(0.01)
    h = h * scale_ref[...] + shift_ref[...]                     # eval BatchNorm1d (folded)
    # TODO(synk): Dropout is eval-mode identity here (no stochastic masking).
    out = jnp.dot(h, w2_ref[...], preferred_element_type=jnp.float32) + b2_ref[...]
    out_ref[...] = out.astype(out_ref.dtype)                    # lane-dense (TP, 2D) store


def pair_mlp(sub_col, obj_col, feats_p, w1a, w1b, b1, scale, shift, w2t, b2, *, tp):
    p_pad = sub_col.shape[0]
    o_pad, d = feats_p.shape
    h = w1a.shape[1]
    out_dim = w2t.shape[1]
    return pl.pallas_call(
        pair_mlp_kernel,
        out_shape=jax.ShapeDtypeStruct((p_pad, out_dim), jnp.float32),
        grid_spec=pltpu.PrefetchScalarGridSpec(
            num_scalar_prefetch=0,
            grid=(p_pad // tp,),
            in_specs=[
                pl.BlockSpec((tp, 1), lambda i: (i, 0)),         # subject ids
                pl.BlockSpec((tp, 1), lambda i: (i, 0)),         # object ids
                pl.BlockSpec((o_pad, d), lambda i: (0, 0)),      # resident object_feats
                pl.BlockSpec((d, h), lambda i: (0, 0)),          # W1[:, :D]^T
                pl.BlockSpec((d, h), lambda i: (0, 0)),          # W1[:, D:]^T
                pl.BlockSpec((1, h), lambda i: (0, 0)),          # b1
                pl.BlockSpec((1, h), lambda i: (0, 0)),          # BN scale (folded)
                pl.BlockSpec((1, h), lambda i: (0, 0)),          # BN shift (folded)
                pl.BlockSpec((h, out_dim), lambda i: (0, 0)),    # W2^T
                pl.BlockSpec((1, out_dim), lambda i: (0, 0)),    # b2
            ],
            out_specs=pl.BlockSpec((tp, out_dim), lambda i: (i, 0)),
        ),
        # Resident blocks are small here; for much larger F/H/O re-derive against the
        # scoped VMEM limit (32 MiB default; 64 MiB physical on v7x) and raise
        # vmem_limit_bytes only as far as needed.
        compiler_params=pltpu.CompilerParams(
            dimension_semantics=("parallel",)),
    )(sub_col, obj_col, feats_p, w1a, w1b, b1, scale, shift, w2t, b2)


# ----------------------------------------------------------------------------
# Kernel 2: per-object softmax-weighted scatter aggregation
# grid = (object tiles,) -- fully parallel; relation outputs + pair metadata VMEM-resident
# ----------------------------------------------------------------------------
def scatter_softmax_kernel(sub_ref, obj_ref, conf_ref, rel_ref, feats_ref, new_ref):
    to, d = feats_ref.shape
    p_pad = conf_ref.shape[1]
    base = pl.program_id(0) * to

    conf = conf_ref[...]                                               # (1, P)
    # Global max-shift: every per-object segment contains the logit CONSTANT, so
    # subtracting max(CONSTANT, max(conf)) leaves every segment softmax unchanged.
    c = jnp.maximum(jnp.max(conf, axis=1, keepdims=True), CONSTANT)    # (1, 1)
    e = jnp.exp(conf - c)                                              # (1, P); pads -> 0
    w_self = jnp.exp(CONSTANT - c)                                     # (1, 1)

    rows = jax.lax.broadcasted_iota(jnp.int32, (to, p_pad), 0) + base  # object ids of tile
    w_sub = jnp.where(rows == sub_ref[...], e, 0.0)                    # (TO, P)
    w_obj = jnp.where(rows == obj_ref[...], e, 0.0)

    rel = rel_ref[...]                                                 # (P, 2D)
    num = (jnp.dot(w_sub, rel[:, :d], preferred_element_type=jnp.float32)
           + jnp.dot(w_obj, rel[:, d:], preferred_element_type=jnp.float32))   # (TO, D)
    den = (jnp.sum(w_sub, axis=1, keepdims=True)
           + jnp.sum(w_obj, axis=1, keepdims=True))                    # (TO, 1)

    x = feats_ref[...]
    new_ref[...] = ((w_self * x + num) / (w_self + den)).astype(new_ref.dtype)


def scatter_softmax(sub_row, obj_row, conf_row, rel_out, feats_p, *, to):
    o_pad, d = feats_p.shape
    p_pad = conf_row.shape[1]
    out_dim = rel_out.shape[1]
    return pl.pallas_call(
        scatter_softmax_kernel,
        out_shape=jax.ShapeDtypeStruct((o_pad, d), jnp.float32),
        grid_spec=pltpu.PrefetchScalarGridSpec(
            num_scalar_prefetch=0,
            grid=(o_pad // to,),
            in_specs=[
                pl.BlockSpec((1, p_pad), lambda i: (0, 0)),        # subject ids (lane row)
                pl.BlockSpec((1, p_pad), lambda i: (0, 0)),        # object ids (lane row)
                pl.BlockSpec((1, p_pad), lambda i: (0, 0)),        # confidences
                pl.BlockSpec((p_pad, out_dim), lambda i: (0, 0)),  # resident relation outputs
                pl.BlockSpec((to, d), lambda i: (i, 0)),           # object_feats tile
            ],
            out_specs=pl.BlockSpec((to, d), lambda i: (i, 0)),
        ),
        # TODO(synk): for very large P add a second ("arbitrary") pair-tile reduction axis
        # instead of keeping the whole (P, 2D) relation output resident.
        compiler_params=pltpu.CompilerParams(
            dimension_semantics=("parallel",)),
    )(sub_row, obj_row, conf_row, rel_out, feats_p)


# ----------------------------------------------------------------------------
# Parameters, hoisted prep, forward wrapper
# ----------------------------------------------------------------------------
def init_bgconv_unit(key, feat_dim, hidden_dim):
    in_dim = 2 * feat_dim      # sum(input_dim)  with input_dim  = [D, D]
    out_dim = 2 * feat_dim     # sum(output_dim) with output_dim = [D, D]
    ks = jax.random.split(key, 8)
    # nn.init.kaiming_normal_ (fan_in, gain=sqrt(2)); default nn.Linear bias init.
    w1 = jax.random.normal(ks[0], (hidden_dim, in_dim), jnp.float32) * math.sqrt(2.0 / in_dim)
    b1 = jax.random.uniform(ks[1], (hidden_dim,), jnp.float32,
                            -1.0 / math.sqrt(in_dim), 1.0 / math.sqrt(in_dim))
    w2 = jax.random.normal(ks[2], (out_dim, hidden_dim), jnp.float32) * math.sqrt(2.0 / hidden_dim)
    b2 = jax.random.uniform(ks[3], (out_dim,), jnp.float32,
                            -1.0 / math.sqrt(hidden_dim), 1.0 / math.sqrt(hidden_dim))
    # BatchNorm1d params / running stats (perturbed so the eval-BN folding is exercised).
    gamma = 1.0 + 0.1 * jax.random.normal(ks[4], (hidden_dim,), jnp.float32)
    beta = 0.1 * jax.random.normal(ks[5], (hidden_dim,), jnp.float32)
    running_mean = 0.1 * jax.random.normal(ks[6], (hidden_dim,), jnp.float32)
    running_var = jax.random.uniform(ks[7], (hidden_dim,), jnp.float32, 0.5, 1.5)
    return dict(w1=w1, b1=b1, w2=w2, b2=b2, gamma=gamma, beta=beta,
                running_mean=running_mean, running_var=running_var)


def prepare_params(params, feat_dim):
    """One-time (hoisted) prep: pre-transposed weights + eval-BN folded scale/shift."""
    hidden = params["w1"].shape[0]
    d = feat_dim
    w1t = params["w1"].T                                    # (2D, H), lane-contiguous
    scale = params["gamma"] / jnp.sqrt(params["running_var"] + BN_EPS)
    shift = params["beta"] - params["running_mean"] * scale
    return dict(
        w1a=w1t[:d], w1b=w1t[d:],
        b1=params["b1"].reshape(1, hidden),
        scale=scale.reshape(1, hidden),
        shift=shift.reshape(1, hidden),
        w2t=params["w2"].T,                                 # (H, 2D)
        b2=params["b2"].reshape(1, -1),
    )


def bgconv_unit_forward(prep, object_feats, pairs, confidence,
                        *, max_pair_tile=256, max_obj_tile=256):
    """BGConv_unit.forward: returns (new_feats, pairs, confidence)."""
    o, _ = object_feats.shape
    p = pairs.shape[0]
    pairs_i = pairs.astype(jnp.int32)

    tp, p_pad = _tile_and_pad(p, max_pair_tile)
    to, o_pad = _tile_and_pad(o, max_obj_tile)

    feats_p = _pad_rows(object_feats.astype(jnp.float32), o_pad)
    pairs_p = _pad_rows(pairs_i, p_pad)                     # padded ids -> 0 (zero weight below)
    sub_col = pairs_p[:, 0:1]
    obj_col = pairs_p[:, 1:2]
    sub_row = pairs_p[:, 0][None, :]
    obj_row = pairs_p[:, 1][None, :]
    conf_row = _pad_rows(confidence.astype(jnp.float32), p_pad, value=NEG_INF)[None, :]

    rel_out = pair_mlp(sub_col, obj_col, feats_p,
                       prep["w1a"], prep["w1b"], prep["b1"],
                       prep["scale"], prep["shift"], prep["w2t"], prep["b2"],
                       tp=tp)                               # (P_pad, 2D)
    new_feats = scatter_softmax(sub_row, obj_row, conf_row, rel_out, feats_p,
                                to=to)[:o]                  # (O, D)
    return new_feats.astype(object_feats.dtype), pairs, confidence


# ----------------------------------------------------------------------------
# Faithful (loopy) reference of the PyTorch forward, in numpy
# ----------------------------------------------------------------------------
def reference_forward(params, object_feats, pairs, confidence):
    feats = np.asarray(object_feats, np.float32)
    prs = np.asarray(pairs, np.int64)
    conf = np.asarray(confidence, np.float32)
    d = feats.shape[1]

    g = feats[prs]                                          # (P, 2, D)
    x = np.concatenate([g[:, 0], g[:, 1]], axis=1)          # (P, 2D)
    h = x @ np.asarray(params["w1"]).T + np.asarray(params["b1"])
    h = np.where(h >= 0, h, LEAKY_SLOPE * h)
    h = ((h - np.asarray(params["running_mean"]))
         / np.sqrt(np.asarray(params["running_var"]) + BN_EPS)
         * np.asarray(params["gamma"]) + np.asarray(params["beta"]))
    out = h @ np.asarray(params["w2"]).T + np.asarray(params["b2"])   # (P, 2D)

    new_feats = feats.copy()
    for key in range(int(prs.max()) + 1):
        flist, clist = [feats[key]], [CONSTANT]
        for q in range(prs.shape[0]):
            s, o_ = int(prs[q, 0]), int(prs[q, 1])
            if s == key:
                flist.append(out[q, :d]); clist.append(float(conf[q]))
            if o_ == key:
                flist.append(out[q, d:]); clist.append(float(conf[q]))
        logits = np.asarray(clist, np.float32)
        w = np.exp(logits - logits.max())
        w /= w.sum()
        new_feats[key] = w @ np.stack(flist).astype(np.float32)
    return new_feats


if __name__ == "__main__":
    O, P = 16, 8                  # objects, pairs
    D, H = 128, 128               # object feature dim (input_dim = output_dim = [D, D]), hidden_dim

    key = jax.random.PRNGKey(0)
    k_feat, k_pair, k_conf, k_par = jax.random.split(key, 4)

    object_feats = jax.random.normal(k_feat, (O, D), jnp.float32)
    pairs = jax.random.randint(k_pair, (P, 2), 0, O, jnp.int32)
    confidence = jax.random.uniform(k_conf, (P,), jnp.float32)

    params = init_bgconv_unit(k_par, D, H)
    prep = prepare_params(params, D)

    fwd = jax.jit(bgconv_unit_forward)
    new_feats, pairs_out, conf_out = fwd(prep, object_feats, pairs, confidence)
    new_feats = jax.block_until_ready(new_feats)

    ref = reference_forward(params, object_feats, pairs, confidence)
    assert new_feats.shape == (O, D)
    assert np.allclose(np.asarray(new_feats), ref, atol=1e-4, rtol=1e-4), \
        "mismatch vs reference"

    print("KERNEL_OK")
</pallas_src>

<mosaic_0001>
module attributes {stable_mosaic.version = 11 : i64} {
  func.func @pair_mlp_kernel(%arg0: i32, %arg1: memref<8x1xi32, #tpu.memory_space<vmem>>, %arg2: memref<8x1xi32, #tpu.memory_space<vmem>>, %arg3: memref<16x128xf32, #tpu.memory_space<vmem>>, %arg4: memref<128x128xf32, #tpu.memory_space<vmem>>, %arg5: memref<128x128xf32, #tpu.memory_space<vmem>>, %arg6: memref<1x128xf32, #tpu.memory_space<vmem>>, %arg7: memref<1x128xf32, #tpu.memory_space<vmem>>, %arg8: memref<1x128xf32, #tpu.memory_space<vmem>>, %arg9: memref<128x256xf32, #tpu.memory_space<vmem>>, %arg10: memref<1x256xf32, #tpu.memory_space<vmem>>, %arg11: memref<8x256xf32, #tpu.memory_space<vmem>>) attributes {dimension_semantics = [#tpu.dimension_semantics<parallel>], iteration_bounds = array<i64: 1>, scalar_prefetch = 0 : i64, scratch_operands = 0 : i64, tpu.core_type = #tpu.core_type<tc>, window_params = [{transform_indices = @transform_0, window_bounds = array<i64: 8, 1>}, {transform_indices = @transform_1, window_bounds = array<i64: 8, 1>}, {pipeline_mode = #tpu.pipeline_mode<synchronous>, transform_indices = @transform_2, window_bounds = array<i64: 16, 128>}, {pipeline_mode = #tpu.pipeline_mode<synchronous>, transform_indices = @transform_3, window_bounds = array<i64: 128, 128>}, {pipeline_mode = #tpu.pipeline_mode<synchronous>, transform_indices = @transform_4, window_bounds = array<i64: 128, 128>}, {pipeline_mode = #tpu.pipeline_mode<synchronous>, transform_indices = @transform_5, window_bounds = array<i64: 1, 128>}, {pipeline_mode = #tpu.pipeline_mode<synchronous>, transform_indices = @transform_6, window_bounds = array<i64: 1, 128>}, {pipeline_mode = #tpu.pipeline_mode<synchronous>, transform_indices = @transform_7, window_bounds = array<i64: 1, 128>}, {pipeline_mode = #tpu.pipeline_mode<synchronous>, transform_indices = @transform_8, window_bounds = array<i64: 128, 256>}, {pipeline_mode = #tpu.pipeline_mode<synchronous>, transform_indices = @transform_9, window_bounds = array<i64: 1, 256>}, {transform_indices = @transform_10, window_bounds = array<i64: 8, 256>}]} {
    %0 = tpu.iota {dimensions = array<i32: 1>} : vector<8x16xi32>
    %c0 = arith.constant 0 : index
    %c0_0 = arith.constant 0 : index
    %1 = vector.load %arg1[%c0, %c0_0] : memref<8x1xi32, #tpu.memory_space<vmem>>, vector<8x1xi32>
    %2 = vector.broadcast %1 : vector<8x1xi32> to vector<8x16xi32>
    %3 = arith.cmpi eq, %0, %2 : vector<8x16xi32>
    %4 = arith.extui %3 : vector<8x16xi1> to vector<8x16xi32>
    %5 = arith.sitofp %4 : vector<8x16xi32> to vector<8x16xf32>
    %c0_1 = arith.constant 0 : index
    %c0_2 = arith.constant 0 : index
    %6 = vector.load %arg2[%c0_1, %c0_2] : memref<8x1xi32, #tpu.memory_space<vmem>>, vector<8x1xi32>
    %7 = vector.broadcast %6 : vector<8x1xi32> to vector<8x16xi32>
    %8 = arith.cmpi eq, %0, %7 : vector<8x16xi32>
    %9 = arith.extui %8 : vector<8x16xi1> to vector<8x16xi32>
    %10 = arith.sitofp %9 : vector<8x16xi32> to vector<8x16xf32>
    %c0_3 = arith.constant 0 : index
    %c0_4 = arith.constant 0 : index
    %11 = vector.load %arg3[%c0_3, %c0_4] : memref<16x128xf32, #tpu.memory_space<vmem>>, vector<16x128xf32>
    %cst = arith.constant dense<0.000000e+00> : vector<8x128xf32>
    %12 = tpu.matmul %5, %11, %cst {dimension_numbers = #tpu.dot_dimension_numbers<[1], [0], [0], [1], [0, 0, 1, 1], [], []>} : vector<8x16xf32>, vector<16x128xf32>, vector<8x128xf32> -> vector<8x128xf32>
    %cst_5 = arith.constant dense<0.000000e+00> : vector<8x128xf32>
    %13 = tpu.matmul %10, %11, %cst_5 {dimension_numbers = #tpu.dot_dimension_numbers<[1], [0], [0], [1], [0, 0, 1, 1], [], []>} : vector<8x16xf32>, vector<16x128xf32>, vector<8x128xf32> -> vector<8x128xf32>
    %c0_6 = arith.constant 0 : index
    %c0_7 = arith.constant 0 : index
    %14 = vector.load %arg4[%c0_6, %c0_7] : memref<128x128xf32, #tpu.memory_space<vmem>>, vector<128x128xf32>
    %cst_8 = arith.constant dense<0.000000e+00> : vector<8x128xf32>
    %15 = tpu.matmul %12, %14, %cst_8 {dimension_numbers = #tpu.dot_dimension_numbers<[1], [0], [0], [1], [0, 0, 1, 1], [], []>} : vector<8x128xf32>, vector<128x128xf32>, vector<8x128xf32> -> vector<8x128xf32>
    %c0_9 = arith.constant 0 : index
    %c0_10 = arith.constant 0 : index
    %16 = vector.load %arg5[%c0_9, %c0_10] : memref<128x128xf32, #tpu.memory_space<vmem>>, vector<128x128xf32>
    %cst_11 = arith.constant dense<0.000000e+00> : vector<8x128xf32>
    %17 = tpu.matmul %13, %16, %cst_11 {dimension_numbers = #tpu.dot_dimension_numbers<[1], [0], [0], [1], [0, 0, 1, 1], [], []>} : vector<8x128xf32>, vector<128x128xf32>, vector<8x128xf32> -> vector<8x128xf32>
    %18 = arith.addf %15, %17 : vector<8x128xf32>
    %c0_12 = arith.constant 0 : index
    %c0_13 = arith.constant 0 : index
    %19 = vector.load %arg6[%c0_12, %c0_13] : memref<1x128xf32, #tpu.memory_space<vmem>>, vector<1x128xf32>
    %20 = vector.broadcast %19 : vector<1x128xf32> to vector<8x128xf32>
    %21 = arith.addf %18, %20 : vector<8x128xf32>
    %cst_14 = arith.constant 0.000000e+00 : f32
    %22 = vector.broadcast %cst_14 : f32 to vector<8x128xf32>
    %23 = arith.cmpf oge, %21, %22 : vector<8x128xf32>
    %cst_15 = arith.constant 0.00999999977 : f32
    %24 = vector.broadcast %cst_15 : f32 to vector<8x128xf32>
    %25 = arith.mulf %24, %21 : vector<8x128xf32>
    %26 = arith.select %23, %21, %25 : vector<8x128xi1>, vector<8x128xf32>
    %c0_16 = arith.constant 0 : index
    %c0_17 = arith.constant 0 : index
    %27 = vector.load %arg7[%c0_16, %c0_17] : memref<1x128xf32, #tpu.memory_space<vmem>>, vector<1x128xf32>
    %28 = vector.broadcast %27 : vector<1x128xf32> to vector<8x128xf32>
    %29 = arith.mulf %26, %28 : vector<8x128xf32>
    %c0_18 = arith.constant 0 : index
    %c0_19 = arith.constant 0 : index
    %30 = vector.load %arg8[%c0_18, %c0_19] : memref<1x128xf32, #tpu.memory_space<vmem>>, vector<1x128xf32>
    %31 = vector.broadcast %30 : vector<1x128xf32> to vector<8x128xf32>
    %32 = arith.addf %29, %31 : vector<8x128xf32>
    %c0_20 = arith.constant 0 : index
    %c0_21 = arith.constant 0 : index
    %33 = vector.load %arg9[%c0_20, %c0_21] : memref<128x256xf32, #tpu.memory_space<vmem>>, vector<128x256xf32>
    %cst_22 = arith.constant dense<0.000000e+00> : vector<8x256xf32>
    %34 = tpu.matmul %32, %33, %cst_22 {dimension_numbers = #tpu.dot_dimension_numbers<[1], [0], [0], [1], [0, 0, 1, 1], [], []>} : vector<8x128xf32>, vector<128x256xf32>, vector<8x256xf32> -> vector<8x256xf32>
    %c0_23 = arith.constant 0 : index
    %c0_24 = arith.constant 0 : index
    %35 = vector.load %arg10[%c0_23, %c0_24] : memref<1x256xf32, #tpu.memory_space<vmem>>, vector<1x256xf32>
    %36 = vector.broadcast %35 : vector<1x256xf32> to vector<8x256xf32>
    %37 = arith.addf %34, %36 : vector<8x256xf32>
    %c0_25 = arith.constant 0 : index
    %c0_26 = arith.constant 0 : index
    %38 = vector.load %arg11[%c0_25, %c0_26] : memref<8x256xf32, #tpu.memory_space<vmem>>, vector<8x256xf32>
    tpu.vector_store %arg11[%c0_25, %c0_26], %37 {strides = array<i32>} : memref<8x256xf32, #tpu.memory_space<vmem>>, vector<8x256xf32>,
    return
  }
  func.func @transform_0(%arg0: i32) -> (i32, i32) {
    %c0_i32 = arith.constant 0 : i32
    %c0_i32_0 = arith.constant 0 : i32
    return %arg0, %c0_i32 : i32, i32
  }
  func.func @transform_1(%arg0: i32) -> (i32, i32) {
    %c0_i32 = arith.constant 0 : i32
    %c0_i32_0 = arith.constant 0 : i32
    return %arg0, %c0_i32 : i32, i32
  }
  func.func @transform_2(%arg0: i32) -> (i32, i32) {
    %c0_i32 = arith.constant 0 : i32
    %c0_i32_0 = arith.constant 0 : i32
    %c0_i32_1 = arith.constant 0 : i32
    return %c0_i32, %c0_i32_0 : i32, i32
  }
  func.func @transform_3(%arg0: i32) -> (i32, i32) {
    %c0_i32 = arith.constant 0 : i32
    %c0_i32_0 = arith.constant 0 : i32
    %c0_i32_1 = arith.constant 0 : i32
    return %c0_i32, %c0_i32_0 : i32, i32
  }
  func.func @transform_4(%arg0: i32) -> (i32, i32) {
    %c0_i32 = arith.constant 0 : i32
    %c0_i32_0 = arith.constant 0 : i32
    %c0_i32_1 = arith.constant 0 : i32
    return %c0_i32, %c0_i32_0 : i32, i32
  }
  func.func @transform_5(%arg0: i32) -> (i32, i32) {
    %c0_i32 = arith.constant 0 : i32
    %c0_i32_0 = arith.constant 0 : i32
    %c0_i32_1 = arith.constant 0 : i32
    return %c0_i32, %c0_i32_0 : i32, i32
  }
  func.func @transform_6(%arg0: i32) -> (i32, i32) {
    %c0_i32 = arith.constant 0 : i32
    %c0_i32_0 = arith.constant 0 : i32
    %c0_i32_1 = arith.constant 0 : i32
    return %c0_i32, %c0_i32_0 : i32, i32
  }
  func.func @transform_7(%arg0: i32) -> (i32, i32) {
    %c0_i32 = arith.constant 0 : i32
    %c0_i32_0 = arith.constant 0 : i32
    %c0_i32_1 = arith.constant 0 : i32
    return %c0_i32, %c0_i32_0 : i32, i32
  }
  func.func @transform_8(%arg0: i32) -> (i32, i32) {
    %c0_i32 = arith.constant 0 : i32
    %c0_i32_0 = arith.constant 0 : i32
    %c0_i32_1 = arith.constant 0 : i32
    return %c0_i32, %c0_i32_0 : i32, i32
  }
  func.func @transform_9(%arg0: i32) -> (i32, i32) {
    %c0_i32 = arith.constant 0 : i32
    %c0_i32_0 = arith.constant 0 : i32
    %c0_i32_1 = arith.constant 0 : i32
    return %c0_i32, %c0_i32_0 : i32, i32
  }
  func.func @transform_10(%arg0: i32) -> (i32, i32) {
    %c0_i32 = arith.constant 0 : i32
    %c0_i32_0 = arith.constant 0 : i32
    return %arg0, %c0_i32 : i32, i32
  }
}

module attributes {stable_mosaic.version = 11 : i64} {
  func.func @scatter_softmax_kernel(%arg0: i32, %arg1: memref<1x8xi32, #tpu.memory_space<vmem>>, %arg2: memref<1x8xi32, #tpu.memory_space<vmem>>, %arg3: memref<1x8xf32, #tpu.memory_space<vmem>>, %arg4: memref<8x256xf32, #tpu.memory_space<vmem>>, %arg5: memref<16x128xf32, #tpu.memory_space<vmem>>, %arg6: memref<16x128xf32, #tpu.memory_space<vmem>>) attributes {dimension_semantics = [#tpu.dimension_semantics<parallel>], iteration_bounds = array<i64: 1>, scalar_prefetch = 0 : i64, scratch_operands = 0 : i64, tpu.core_type = #tpu.core_type<tc>, window_params = [{pipeline_mode = #tpu.pipeline_mode<synchronous>, transform_indices = @transform_0, window_bounds = array<i64: 1, 8>}, {pipeline_mode = #tpu.pipeline_mode<synchronous>, transform_indices = @transform_1, window_bounds = array<i64: 1, 8>}, {pipeline_mode = #tpu.pipeline_mode<synchronous>, transform_indices = @transform_2, window_bounds = array<i64: 1, 8>}, {pipeline_mode = #tpu.pipeline_mode<synchronous>, transform_indices = @transform_3, window_bounds = array<i64: 8, 256>}, {transform_indices = @transform_4, window_bounds = array<i64: 16, 128>}, {transform_indices = @transform_5, window_bounds = array<i64: 16, 128>}]} {
    %c16_i32 = arith.constant 16 : i32
    %0 = arith.muli %arg0, %c16_i32 : i32
    %c0 = arith.constant 0 : index
    %c0_0 = arith.constant 0 : index
    %1 = vector.load %arg3[%c0, %c0_0] : memref<1x8xf32, #tpu.memory_space<vmem>>, vector<1x8xf32>
    %cst = arith.constant dense<0xFF800000> : vector<1xf32>
    %2 = vector.multi_reduction <maximumf>, %1, %cst [1] : vector<1x8xf32> to vector<1xf32>
    %3 = vector.shape_cast %2 : vector<1xf32> to vector<1x1xf32>
    %cst_1 = arith.constant 1.000000e+01 : f32
    %4 = vector.broadcast %cst_1 : f32 to vector<1x1xf32>
    %5 = arith.maximumf %3, %4 : vector<1x1xf32>
    %6 = vector.broadcast %5 : vector<1x1xf32> to vector<1x8xf32>
    %7 = arith.subf %1, %6 : vector<1x8xf32>
    %8 = math.exp %7 : vector<1x8xf32>
    %cst_2 = arith.constant 1.000000e+01 : f32
    %9 = vector.broadcast %cst_2 : f32 to vector<1x1xf32>
    %10 = arith.subf %9, %5 : vector<1x1xf32>
    %11 = math.exp %10 : vector<1x1xf32>
    %12 = tpu.iota {dimensions = array<i32: 0>} : vector<16x8xi32>
    %13 = vector.broadcast %0 : i32 to vector<16x8xi32>
    %14 = arith.addi %12, %13 : vector<16x8xi32>
    %c0_3 = arith.constant 0 : index
    %c0_4 = arith.constant 0 : index
    %15 = vector.load %arg1[%c0_3, %c0_4] : memref<1x8xi32, #tpu.memory_space<vmem>>, vector<1x8xi32>
    %16 = vector.broadcast %15 : vector<1x8xi32> to vector<16x8xi32>
    %17 = arith.cmpi eq, %14, %16 : vector<16x8xi32>
    %cst_5 = arith.constant 0.000000e+00 : f32
    %18 = vector.shape_cast %8 : vector<1x8xf32> to vector<1x8xf32>
    %19 = vector.broadcast %18 : vector<1x8xf32> to vector<16x8xf32>
    %20 = vector.broadcast %cst_5 : f32 to vector<16x8xf32>
    %21 = arith.select %17, %19, %20 : vector<16x8xi1>, vector<16x8xf32>
    %c0_6 = arith.constant 0 : index
    %c0_7 = arith.constant 0 : index
    %22 = vector.load %arg2[%c0_6, %c0_7] : memref<1x8xi32, #tpu.memory_space<vmem>>, vector<1x8xi32>
    %23 = vector.broadcast %22 : vector<1x8xi32> to vector<16x8xi32>
    %24 = arith.cmpi eq, %14, %23 : vector<16x8xi32>
    %cst_8 = arith.constant 0.000000e+00 : f32
    %25 = vector.shape_cast %8 : vector<1x8xf32> to vector<1x8xf32>
    %26 = vector.broadcast %25 : vector<1x8xf32> to vector<16x8xf32>
    %27 = vector.broadcast %cst_8 : f32 to vector<16x8xf32>
    %28 = arith.select %24, %26, %27 : vector<16x8xi1>, vector<16x8xf32>
    %c0_9 = arith.constant 0 : index
    %c0_10 = arith.constant 0 : index
    %29 = vector.load %arg4[%c0_9, %c0_10] : memref<8x256xf32, #tpu.memory_space<vmem>>, vector<8x256xf32>
    %30 = vector.extract_strided_slice %29 {offsets = [0, 0], sizes = [8, 128], strides = [1, 1]} : vector<8x256xf32> to vector<8x128xf32>
    %cst_11 = arith.constant dense<0.000000e+00> : vector<16x128xf32>
    %31 = tpu.matmul %21, %30, %cst_11 {dimension_numbers = #tpu.dot_dimension_numbers<[1], [0], [0], [1], [0, 0, 1, 1], [], []>} : vector<16x8xf32>, vector<8x128xf32>, vector<16x128xf32> -> vector<16x128xf32>
    %32 = vector.extract_strided_slice %29 {offsets = [0, 128], sizes = [8, 128], strides = [1, 1]} : vector<8x256xf32> to vector<8x128xf32>
    %cst_12 = arith.constant dense<0.000000e+00> : vector<16x128xf32>
    %33 = tpu.matmul %28, %32, %cst_12 {dimension_numbers = #tpu.dot_dimension_numbers<[1], [0], [0], [1], [0, 0, 1, 1], [], []>} : vector<16x8xf32>, vector<8x128xf32>, vector<16x128xf32> -> vector<16x128xf32>
    %34 = arith.addf %31, %33 : vector<16x128xf32>
    %cst_13 = arith.constant dense<0.000000e+00> : vector<16xf32>
    %35 = vector.multi_reduction <add>, %21, %cst_13 [1] : vector<16x8xf32> to vector<16xf32>
    %36 = vector.shape_cast %35 : vector<16xf32> to vector<16x1xf32>
    %cst_14 = arith.constant dense<0.000000e+00> : vector<16xf32>
    %37 = vector.multi_reduction <add>, %28, %cst_14 [1] : vector<16x8xf32> to vector<16xf32>
    %38 = vector.shape_cast %37 : vector<16xf32> to vector<16x1xf32>
    %39 = arith.addf %36, %38 : vector<16x1xf32>
    %c0_15 = arith.constant 0 : index
    %c0_16 = arith.constant 0 : index
    %40 = vector.load %arg5[%c0_15, %c0_16] : memref<16x128xf32, #tpu.memory_space<vmem>>, vector<16x128xf32>
    %41 = vector.broadcast %11 : vector<1x1xf32> to vector<16x128xf32>
    %42 = arith.mulf %41, %40 : vector<16x128xf32>
    %43 = arith.addf %42, %34 : vector<16x128xf32>
    %44 = vector.broadcast %11 : vector<1x1xf32> to vector<16x1xf32>
    %45 = arith.addf %44, %39 : vector<16x1xf32>
    %46 = vector.broadcast %45 : vector<16x1xf32> to vector<16x128xf32>
    %47 = arith.divf %43, %46 : vector<16x128xf32>
    %c0_17 = arith.constant 0 : index
    %c0_18 = arith.constant 0 : index
    %48 = vector.load %arg6[%c0_17, %c0_18] : memref<16x128xf32, #tpu.memory_space<vmem>>, vector<16x128xf32>
    tpu.vector_store %arg6[%c0_17, %c0_18], %47 {strides = array<i32>} : memref<16x128xf32, #tpu.memory_space<vmem>>, vector<16x128xf32>,
    return
  }
  func.func @transform_0(%arg0: i32) -> (i32, i32) {
    %c0_i32 = arith.constant 0 : i32
    %c0_i32_0 = arith.constant 0 : i32
    %c0_i32_1 = arith.constant 0 : i32
    return %c0_i32, %c0_i32_0 : i32, i32
  }
  func.func @transform_1(%arg0: i32) -> (i32, i32) {
    %c0_i32 = arith.constant 0 : i32
    %c0_i32_0 = arith.constant 0 : i32
    %c0_i32_1 = arith.constant 0 : i32
    return %c0_i32, %c0_i32_0 : i32, i32
  }
  func.func @transform_2(%arg0: i32) -> (i32, i32) {
    %c0_i32 = arith.constant 0 : i32
    %c0_i32_0 = arith.constant 0 : i32
    %c0_i32_1 = arith.constant 0 : i32
    return %c0_i32, %c0_i32_0 : i32, i32
  }
  func.func @transform_3(%arg0: i32) -> (i32, i32) {
    %c0_i32 = arith.constant 0 : i32
    %c0_i32_0 = arith.constant 0 : i32
    %c0_i32_1 = arith.constant 0 : i32
    return %c0_i32, %c0_i32_0 : i32, i32
  }
  func.func @transform_4(%arg0: i32) -> (i32, i32) {
    %c0_i32 = arith.constant 0 : i32
    %c0_i32_0 = arith.constant 0 : i32
    return %arg0, %c0_i32 : i32, i32
  }
  func.func @transform_5(%arg0: i32) -> (i32, i32) {
    %c0_i32 = arith.constant 0 : i32
    %c0_i32_0 = arith.constant 0 : i32
    return %arg0, %c0_i32 : i32, i32
  }
}

</mosaic_0001>

<llo_original>
// kernel: bgconv_unit_forward.3
$region0: #{bgconv_unit_forward.3}
  #allocation0 [shape = 'u32[]', space=smem, size = 0x4, offset = 0x4, fixed_abs, tag = 'smem constant byte address 0x4 - core index']
  #allocation1 [shape = 'u32[72,128]{1,0:T(1,128)}', space=vmem, size = 0x9000, scoped, tag = 'internal scratch']
  %s0 = inlined_call_operand.vmem [shape: s32[1,8], index: 0, kind: input, shape index: {}]
  %s1 = inlined_call_operand.vmem [shape: s32[1,8], index: 1, kind: input, shape index: {}]
  %s2 = inlined_call_operand.vmem [shape: f32[1,8], index: 2, kind: input, shape index: {}]
  %s3 = inlined_call_operand.vmem [shape: f32[8,256], index: 3, kind: input, shape index: {}]
  %s4 = inlined_call_operand.vmem [shape: f32[16,128], index: 4, kind: input, shape index: {}]
  %s5 = inlined_call_operand.hbm [shape: f32[16,128], index: 5, kind: output, shape index: {}]
  %s6 = sld [smem:[#allocation0]]
  $region30: #{bgconv_unit_forward.3} parent=0
    _
  %s8 = ssub.s32 1, %s6
  %s9 = scalar_select 0, %s8, %s6
  $region1: #{bgconv_unit_forward.3} parent=0
    #allocation2 [shape = 'u8[8192]{0}', space=vmem, size = 0x2000, scoped, tag = 'output window, operand 0, single buffered']
    #allocation3 [shape = 's32[1]{0}', space=sflag, size = 0x4, scoped, tag = 'scoped memory for bgconv_unit_forward.3']
    %10 = vsyncpa [#allocation3], 0
    // Predicated region
    $region2: #{bgconv_unit_forward.3} parent=1 // pred_check
      _
    $region3: #{bgconv_unit_forward.3} parent=1 // pred_check_branch
      %12 = sbr.rel (0) target = $region5
    $region4: #{bgconv_unit_forward.3} parent=1 // pred_region
      _
    $region5: #{bgconv_unit_forward.3} parent=1 // pred_fallthru
      _
    // Predicated region
    $region6: #{bgconv_unit_forward.3} parent=1 // pred_check
      _
    $region7: #{bgconv_unit_forward.3} parent=1 // pred_check_branch
      %14 = sbr.rel (0) target = $region9
    $region8: #{bgconv_unit_forward.3} parent=1 // pred_region
      _
    $region9: #{bgconv_unit_forward.3} parent=1 // pred_fallthru
      _
    // Predicated region
    $region10: #{bgconv_unit_forward.3} parent=1 // pred_check
      _
    $region11: #{bgconv_unit_forward.3} parent=1 // pred_check_branch
      %16 = sbr.rel (0) target = $region13
    $region12: #{bgconv_unit_forward.3} parent=1 // pred_region
      _
    $region13: #{bgconv_unit_forward.3} parent=1 // pred_fallthru
      _
    // Predicated region
    $region14: #{bgconv_unit_forward.3} parent=1 // pred_check
      _
    $region15: #{bgconv_unit_forward.3} parent=1 // pred_check_branch
      %18 = sbr.rel (0) target = $region17
    $region16: #{bgconv_unit_forward.3} parent=1 // pred_region
      _
    $region17: #{bgconv_unit_forward.3} parent=1 // pred_fallthru
      _
    // Predicated region
    $region18: #{bgconv_unit_forward.3} parent=1 // pred_check
      _
    $region19: #{bgconv_unit_forward.3} parent=1 // pred_check_branch
      %20 = sbr.rel (0) target = $region21
    $region20: #{bgconv_unit_forward.3} parent=1 // pred_region
      _
    $region21: #{bgconv_unit_forward.3} parent=1 // pred_fallthru
      _
    %s21 = smul.u32 0, 16
    %v22 = vld [vmem:[%s2] sm:$0x1]
    %vm23 = vcmask 57344
    %v24 = vsel %vm23, %v22, -inf
    %25 = vmax.xlane.f32.xlu0 %v24
    %v26 = vpop.xlane.xlu0 %25
    %v27 = vmax.f32 %v26, 10.0
    %v28 = vsub.f32 %v22, %v27
    %v29 = vmul.f32 %v28, 1.442695
    %v30 = vpow.pop %v29
    %v31 = vsub.f32 10.0, %v27
    %v32 = vmul.f32 %v31, 1.442695
    %v33 = vpow.pop %v32
    %v34 = vlaneseq
    %v35 = vshrl.u32 %v34, 7
    %v36 = vadd.s32 %v35, 8
    %v37 = vstv %s21
    %v38 = vadd.s32 %v35, %v37
    %v39 = vadd.s32 %v36, %v37
    %v40 = vld [vmem:[%s0] sm:$0x1]
    %v41 = vperm.slane %v40, 0
    %vm42 = vcmp.eq.s32.totalorder %v38, %v41
    %vm43 = vcmp.eq.s32.totalorder %v39, %v41
    %v45 = vperm.slane %v30, 0
    %v47 = vsel %vm42, %v45, 0.0
    %v48 = vsel %vm43, %v45, 0.0
    %v49 = vld [vmem:[%s1] sm:$0x1]
    %v50 = vperm.slane %v49, 0
    %vm51 = vcmp.eq.s32.totalorder %v38, %v50
    %vm52 = vcmp.eq.s32.totalorder %v39, %v50
    %v53 = vsel %vm51, %v45, 0.0
    %v54 = vsel %vm52, %v45, 0.0
    %v55 = vld [vmem:[%s3] sm:$0xff]
    %v56 = vld [vmem:[%s3 + $0x8] sm:$0xff]
    %vm57 = vcmask 64512
    %v59 = vsel %vm57, %v53, 0
    %v62 = vsel %vm57, %v54, 0
    %64 = vmatpush.msra.mxu0 0.0
    %65 = vmatpush.msra.mxu0 0.0
    %66 = vmatpush.msra.mxu0 0.0
    %67 = vmatpush.msra.mxu0 0.0
    %68 = vmatpush.msra.mxu0 0.0
    %69 = vmatpush.msra.mxu0 0.0
    %70 = vmatpush.msra.mxu0 0.0
    %71 = vmatpush.msra.mxu0 0.0
    %72 = vmatpush.msra.mxu0 0.0
    %73 = vmatpush.msra.mxu0 0.0
    %74 = vmatpush.msra.mxu0 0.0
    %75 = vmatpush.msra.mxu0 0.0
    %76 = vmatpush.msra.mxu0 0.0
    %77 = vmatpush.msra.mxu0 0.0
    %78 = vmatpush.msra.mxu0 0.0
    %79 = vmatpush.msra.mxu0 %v56
    %80 = vmatmul.f32.gmra.mxu0 %v59
    %v81 = vpop.f32.mrf.mxu0
    %v82 = vadd.f32 0.0, %v81
    %83 = vmatmul.f32.gmra.mxu0 %v62
    %v84 = vpop.f32.mrf.mxu0
    %v85 = vadd.f32 0.0, %v84
    %86 = vdwg.mxu0
    %v88 = vsel %vm57, %v47, 0
    %v91 = vsel %vm57, %v48, 0
    %93 = vmatpush.msra.mxu0 0.0
    %94 = vmatpush.msra.mxu0 0.0
    %95 = vmatpush.msra.mxu0 0.0
    %96 = vmatpush.msra.mxu0 0.0
    %97 = vmatpush.msra.mxu0 0.0
    %98 = vmatpush.msra.mxu0 0.0
    %99 = vmatpush.msra.mxu0 0.0
    %100 = vmatpush.msra.mxu0 0.0
    %101 = vmatpush.msra.mxu0 0.0
    %102 = vmatpush.msra.mxu0 0.0
    %103 = vmatpush.msra.mxu0 0.0
    %104 = vmatpush.msra.mxu0 0.0
    %105 = vmatpush.msra.mxu0 0.0
    %106 = vmatpush.msra.mxu0 0.0
    %107 = vmatpush.msra.mxu0 0.0
    %108 = vmatpush.msra.mxu0 %v55
    %109 = vmatmul.f32.gmra.mxu0 %v88
    %v110 = vpop.f32.mrf.mxu0
    %v111 = vadd.f32 %v82, %v110
    %112 = vmatmul.f32.gmra.mxu0 %v91
    %v113 = vpop.f32.mrf.mxu0
    %v114 = vadd.f32 %v85, %v113
    %115 = vdwg.mxu0
    %v116 = vsel %vm57, %v47, 0.0
    %117 = vadd.xlane.f32.xlu0 %v116
    %v118 = vpop.xlane.xlu0 %117
    %v119 = vsel %vm57, %v48, 0.0
    %120 = vadd.xlane.f32.xlu0 %v119
    %v121 = vpop.xlane.xlu0 %120
    %v122 = vsel %vm57, %v53, 0.0
    %123 = vadd.xlane.f32.xlu0 %v122
    %v124 = vpop.xlane.xlu0 %123
    %v125 = vsel %vm57, %v54, 0.0
    %126 = vadd.xlane.f32.xlu0 %v125
    %v127 = vpop.xlane.xlu0 %126
    %v128 = vadd.f32 %v118, %v124
    %v129 = vadd.f32 %v121, %v127
    %v130 = vld [vmem:[%s4] sm:$0xff]
    %v131 = vld [vmem:[%s4 + $0x8] sm:$0xff]
    %v132 = vperm.slane %v33, 0
    %v133 = vmul.f32 %v132, %v130
    %v134 = vmul.f32 %v132, %v131
    %v135 = vadd.f32 %v133, %v111
    %v136 = vadd.f32 %v134, %v114
    %v137 = vadd.f32 %v132, %v128
    %v138 = vadd.f32 %v132, %v129
    %v139 = vrcp.pop %v137
    %v140 = vmul.f32 %v137, %v139
    %v141 = vsub.f32 1.0, %v140
    %v142 = vmul.f32 %v139, %v141
    %v143 = vadd.f32 %v139, %v142
    %vm144 = vweird.f32 %v137
    %vm145 = vweird.f32 %v139
    %vm146 = vmor %vm144, %vm145
    %v147 = vsel %vm146, %v139, %v143
    %v148 = vand.u32 2147483647, %v137
    %vm149 = vcmp.eq.f32.partialorder %v148, 8.507059e+37
    %v150 = vand.u32 %v137, 2147483648
    %v151 = vor.u32 1.1754944e-38, %v150
    %v152 = vsel %vm149, %v151, %v147
    %v153 = vmul.f32 %v135, %v152
    %v154 = vrcp.pop %v138
    %v155 = vmul.f32 %v138, %v154
    %v156 = vsub.f32 1.0, %v155
    %v157 = vmul.f32 %v154, %v156
    %v158 = vadd.f32 %v154, %v157
    %vm159 = vweird.f32 %v138
    %vm160 = vweird.f32 %v154
    %vm161 = vmor %vm159, %vm160
    %v162 = vsel %vm161, %v154, %v158
    %v163 = vand.u32 2147483647, %v138
    %vm164 = vcmp.eq.f32.partialorder %v163, 8.507059e+37
    %v165 = vand.u32 %v138, 2147483648
    %v166 = vor.u32 1.1754944e-38, %v165
    %v167 = vsel %vm164, %v166, %v162
    %v168 = vmul.f32 %v136, %v167
    %169 = vst [vmem:[#allocation2] sm:$0xff] %v153
    %170 = vst [vmem:[#allocation2 + $0x8] sm:$0xff] %v168
    // Predicated region
    $region22: #{bgconv_unit_forward.3} parent=1 // pred_check
      _
    $region23: #{bgconv_unit_forward.3} parent=1 // pred_check_branch
      %172 = sbr.rel (0) target = $region25
    $region24: #{bgconv_unit_forward.3} parent=1 // pred_region
      %174 = vsyncadd [#allocation3], 0
      %s175 = sshll.u32 [#allocation2], 4
      %s176 = int_to_ptr.vmem [resolvable:$true] %s175
      %s177 = sshll.u32 %s5, 4
      %s178 = int_to_ptr.hbm [resolvable:$true] %s177
      %183 = dma.vmem_to_hbm [thread:$0]  %s176, 256, %s178, [#allocation3], 128, 128, 8
    $region25: #{bgconv_unit_forward.3} parent=1 // pred_fallthru
      _
    // Predicated region
    $region26: #{bgconv_unit_forward.3} parent=1 // pred_check
      _
    $region27: #{bgconv_unit_forward.3} parent=1 // pred_check_branch
      %185 = sbr.rel (0) target = $region29
    $region28: #{bgconv_unit_forward.3} parent=1 // pred_region
      %187 = dma.done [#allocation3], 256
    $region29: #{bgconv_unit_forward.3} parent=1 // pred_fallthru
      _
    %188 = vsyncpa [#allocation3], 1

// kernel: bgconv_unit_forward.2
$region0: #{bgconv_unit_forward.2}
  #allocation0 [shape = 'u32[]', space=smem, size = 0x4, offset = 0x4, fixed_abs, tag = 'smem constant byte address 0x4 - core index']
  #allocation1 [shape = 'u32[72,128]{1,0:T(1,128)}', space=vmem, size = 0x9000, scoped, tag = 'internal scratch']
  %s0 = inlined_call_operand.vmem [shape: s32[8,1], index: 0, kind: input, shape index: {}]
  %s1 = inlined_call_operand.vmem [shape: s32[8,1], index: 1, kind: input, shape index: {}]
  %s2 = inlined_call_operand.vmem [shape: f32[16,128], index: 2, kind: input, shape index: {}]
  %s3 = inlined_call_operand.hbm [shape: f32[128,128], index: 3, kind: input, shape index: {}]
  %s4 = inlined_call_operand.hbm [shape: f32[128,128], index: 4, kind: input, shape index: {}]
  %s5 = inlined_call_operand.vmem [shape: f32[1,128], index: 5, kind: input, shape index: {}]
  %s6 = inlined_call_operand.vmem [shape: f32[1,128], index: 6, kind: input, shape index: {}]
  %s7 = inlined_call_operand.vmem [shape: f32[1,128], index: 7, kind: input, shape index: {}]
  %s8 = inlined_call_operand.hbm [shape: f32[128,256], index: 8, kind: input, shape index: {}]
  %s9 = inlined_call_operand.vmem [shape: f32[1,256], index: 9, kind: input, shape index: {}]
  %s10 = inlined_call_operand.vmem [shape: f32[8,256], index: 10, kind: output, shape index: {}]
  %s11 = sld [smem:[#allocation0]]
  $region62: #{bgconv_unit_forward.2} parent=0
    _
  %s13 = ssub.s32 1, %s11
  %s14 = scalar_select 0, %s13, %s11
  $region1: #{bgconv_unit_forward.2} parent=0
    #allocation2 [shape = 'u8[65536]{0}', space=vmem, size = 0x10000, scoped, tag = 'input window, operand 3, single buffered']
    #allocation3 [shape = 's32[1]{0}', space=sflag, size = 0x4, scoped, tag = 'scoped memory for bgconv_unit_forward.2']
    #allocation4 [shape = 'u8[65536]{0}', space=vmem, size = 0x10000, scoped, tag = 'input window, operand 4, single buffered']
    #allocation5 [shape = 's32[1]{0}', space=sflag, size = 0x4, scoped, tag = 'scoped memory for bgconv_unit_forward.2']
    #allocation6 [shape = 'u8[131072]{0}', space=vmem, size = 0x20000, scoped, tag = 'input window, operand 8, single buffered']
    %15 = vsyncpa [#allocation3], 0
    %16 = vsyncpa [#allocation5], 0
    // Predicated region
    $region2: #{bgconv_unit_forward.2} parent=1 // pred_check
      _
    $region3: #{bgconv_unit_forward.2} parent=1 // pred_check_branch
      %18 = sbr.rel (0) target = $region5
    $region4: #{bgconv_unit_forward.2} parent=1 // pred_region
      _
    $region5: #{bgconv_unit_forward.2} parent=1 // pred_fallthru
      _
    // Predicated region
    $region6: #{bgconv_unit_forward.2} parent=1 // pred_check
      _
    $region7: #{bgconv_unit_forward.2} parent=1 // pred_check_branch
      %20 = sbr.rel (0) target = $region9
    $region8: #{bgconv_unit_forward.2} parent=1 // pred_region
      _
    $region9: #{bgconv_unit_forward.2} parent=1 // pred_fallthru
      _
    // Predicated region
    $region10: #{bgconv_unit_forward.2} parent=1 // pred_check
      _
    $region11: #{bgconv_unit_forward.2} parent=1 // pred_check_branch
      %22 = sbr.rel (0) target = $region13
    $region12: #{bgconv_unit_forward.2} parent=1 // pred_region
      _
    $region13: #{bgconv_unit_forward.2} parent=1 // pred_fallthru
      _
    // Predicated region
    $region14: #{bgconv_unit_forward.2} parent=1 // pred_check
      _
    $region15: #{bgconv_unit_forward.2} parent=1 // pred_check_branch
      %24 = sbr.rel (0) target = $region17
    $region16: #{bgconv_unit_forward.2} parent=1 // pred_region
      %26 = vsyncadd [#allocation3], 0
      %s27 = sshll.u32 %s3, 4
      %s28 = int_to_ptr.hbm [resolvable:$true] %s27
      %s29 = sshll.u32 [#allocation2], 4
      %s30 = int_to_ptr.vmem [resolvable:$true] %s29
      %35 = dma.hbm_to_vmem [thread:$0]  %s28, 2048, %s30, [#allocation3], 128, 128, 8
    $region17: #{bgconv_unit_forward.2} parent=1 // pred_fallthru
      _
    // Predicated region
    $region18: #{bgconv_unit_forward.2} parent=1 // pred_check
      _
    $region19: #{bgconv_unit_forward.2} parent=1 // pred_check_branch
      %37 = sbr.rel (0) target = $region21
    $region20: #{bgconv_unit_forward.2} parent=1 // pred_region
      %39 = vsyncadd [#allocation5], 0
      %s40 = sshll.u32 %s4, 4
      %s41 = int_to_ptr.hbm [resolvable:$true] %s40
      %s42 = sshll.u32 [#allocation4], 4
      %s43 = int_to_ptr.vmem [resolvable:$true] %s42
      %48 = dma.hbm_to_vmem [thread:$0]  %s41, 2048, %s43, [#allocation5], 128, 128, 8
    $region21: #{bgconv_unit_forward.2} parent=1 // pred_fallthru
      _
    // Predicated region
    $region22: #{bgconv_unit_forward.2} parent=1 // pred_check
      _
    $region23: #{bgconv_unit_forward.2} parent=1 // pred_check_branch
      %50 = sbr.rel (0) target = $region25
    $region24: #{bgconv_unit_forward.2} parent=1 // pred_region
      _
    $region25: #{bgconv_unit_forward.2} parent=1 // pred_fallthru
      _
    // Predicated region
    $region26: #{bgconv_unit_forward.2} parent=1 // pred_check
      _
    $region27: #{bgconv_unit_forward.2} parent=1 // pred_check_branch
      %52 = sbr.rel (0) target = $region29
    $region28: #{bgconv_unit_forward.2} parent=1 // pred_region
      _
    $region29: #{bgconv_unit_forward.2} parent=1 // pred_fallthru
      _
    // Predicated region
    $region30: #{bgconv_unit_forward.2} parent=1 // pred_check
      _
    $region31: #{bgconv_unit_forward.2} parent=1 // pred_check_branch
      %54 = sbr.rel (0) target = $region33
    $region32: #{bgconv_unit_forward.2} parent=1 // pred_region
      _
    $region33: #{bgconv_unit_forward.2} parent=1 // pred_fallthru
      _
    // Predicated region
    $region34: #{bgconv_unit_forward.2} parent=1 // pred_check
      _
    $region35: #{bgconv_unit_forward.2} parent=1 // pred_check_branch
      %56 = sbr.rel (0) target = $region37
    $region36: #{bgconv_unit_forward.2} parent=1 // pred_region
      %58 = vsyncadd [#allocation5], 0
      %s59 = sshll.u32 %s8, 4
      %s60 = int_to_ptr.hbm [resolvable:$true] %s59
      %s61 = sshll.u32 [#allocation6], 4
      %s62 = int_to_ptr.vmem [resolvable:$true] %s61
      %67 = dma.hbm_to_vmem [thread:$0]  %s60, 4096, %s62, [#allocation5], 256, 256, 16
    $region37: #{bgconv_unit_forward.2} parent=1 // pred_fallthru
      _
    // Predicated region
    $region38: #{bgconv_unit_forward.2} parent=1 // pred_check
      _
    $region39: #{bgconv_unit_forward.2} parent=1 // pred_check_branch
      %69 = sbr.rel (0) target = $region41
    $region40: #{bgconv_unit_forward.2} parent=1 // pred_region
      _
    $region41: #{bgconv_unit_forward.2} parent=1 // pred_fallthru
      _
    // Predicated region
    $region42: #{bgconv_unit_forward.2} parent=1 // pred_check
      _
    $region43: #{bgconv_unit_forward.2} parent=1 // pred_check_branch
      %71 = sbr.rel (0) target = $region45
    $region44: #{bgconv_unit_forward.2} parent=1 // pred_region
      %73 = dma.done [#allocation3], 2048
    $region45: #{bgconv_unit_forward.2} parent=1 // pred_fallthru
      _
    // Predicated region
    $region46: #{bgconv_unit_forward.2} parent=1 // pred_check
      _
    $region47: #{bgconv_unit_forward.2} parent=1 // pred_check_branch
      %75 = sbr.rel (0) target = $region49
    $region48: #{bgconv_unit_forward.2} parent=1 // pred_region
      %77 = dma.done [#allocation5], 2048
    $region49: #{bgconv_unit_forward.2} parent=1 // pred_fallthru
      _
    // Predicated region
    $region50: #{bgconv_unit_forward.2} parent=1 // pred_check
      _
    $region51: #{bgconv_unit_forward.2} parent=1 // pred_check_branch
      %79 = sbr.rel (0) target = $region53
    $region52: #{bgconv_unit_forward.2} parent=1 // pred_region
      %81 = dma.done [#allocation5], 4096
    $region53: #{bgconv_unit_forward.2} parent=1 // pred_fallthru
      _
    %v82 = vlaneseq
    %v83 = vand.u32 %v82, 127
    %v84 = vld [vmem:[%s0] sm:$0xff]
    %85 = vset.pattern.permute.xlu0 0
    %86 = vperm.xlu0 %85, %v84
    %v87 = vpop.permute.xlu0 %86
    %vm88 = vcmp.eq.s32.totalorder %v83, %v87
    %v89 = vsel %vm88, 1, 0
    %v90 = vcvt.s32.f32 %v89
    %v91 = vld [vmem:[%s1] sm:$0xff]
    %92 = vset.pattern.permute.xlu0 0
    %93 = vperm.xlu0 %92, %v91
    %v94 = vpop.permute.xlu0 %93
    %vm95 = vcmp.eq.s32.totalorder %v83, %v94
    %v96 = vsel %vm95, 1, 0
    %v97 = vcvt.s32.f32 %v96
    %v98 = vld [vmem:[%s2] sm:$0xff]
    %v99 = vld [vmem:[%s2 + $0x8] sm:$0xff]
    %vm100 = vcmask 130048
    %v102 = vsel %vm100, %v90, 0
    %104 = vmatpush.msra.mxu0 0.0
    %105 = vmatpush.msra.mxu0 0.0
    %106 = vmatpush.msra.mxu0 0.0
    %107 = vmatpush.msra.mxu0 0.0
    %108 = vmatpush.msra.mxu0 0.0
    %109 = vmatpush.msra.mxu0 0.0
    %110 = vmatpush.msra.mxu0 0.0
    %111 = vmatpush.msra.mxu0 0.0
    %112 = vmatpush.msra.mxu0 0.0
    %113 = vmatpush.msra.mxu0 0.0
    %114 = vmatpush.msra.mxu0 0.0
    %115 = vmatpush.msra.mxu0 0.0
    %116 = vmatpush.msra.mxu0 0.0
    %117 = vmatpush.msra.mxu0 0.0
    %118 = vmatpush.msra.mxu0 %v99
    %119 = vmatpush.msra.mxu0 %v98
    %120 = vmatmul.f32.gmra.mxu0 %v102
    %v121 = vpop.f32.mrf.mxu0
    %v122 = vadd.f32 0.0, %v121
    %123 = vdwg.mxu0
    %v125 = vsel %vm100, %v97, 0
    %127 = vmatpush.msra.mxu0 0.0
    %128 = vmatpush.msra.mxu0 0.0
    %129 = vmatpush.msra.mxu0 0.0
    %130 = vmatpush.msra.mxu0 0.0
    %131 = vmatpush.msra.mxu0 0.0
    %132 = vmatpush.msra.mxu0 0.0
    %133 = vmatpush.msra.mxu0 0.0
    %134 = vmatpush.msra.mxu0 0.0
    %135 = vmatpush.msra.mxu0 0.0
    %136 = vmatpush.msra.mxu0 0.0
    %137 = vmatpush.msra.mxu0 0.0
    %138 = vmatpush.msra.mxu0 0.0
    %139 = vmatpush.msra.mxu0 0.0
    %140 = vmatpush.msra.mxu0 0.0
    %141 = vmatpush.msra.mxu0 %v99
    %142 = vmatpush.msra.mxu0 %v98
    %143 = vmatmul.f32.gmra.mxu0 %v125
    %v144 = vpop.f32.mrf.mxu0
    %v145 = vadd.f32 0.0, %v144
    %146 = vdwg.mxu0
    %v147 = vld [vmem:[#allocation2] sm:$0xff]
    %v148 = vld [vmem:[#allocation2 + $0x8] sm:$0xff]
    %v149 = vld [vmem:[#allocation2 + $0x10] sm:$0xff]
    %v150 = vld [vmem:[#allocation2 + $0x18] sm:$0xff]
    %v151 = vld [vmem:[#allocation2 + $0x20] sm:$0xff]
    %v152 = vld [vmem:[#allocation2 + $0x28] sm:$0xff]
    %v153 = vld [vmem:[#allocation2 + $0x30] sm:$0xff]
    %v154 = vld [vmem:[#allocation2 + $0x38] sm:$0xff]
    %v155 = vld [vmem:[#allocation2 + $0x40] sm:$0xff]
    %v156 = vld [vmem:[#allocation2 + $0x48] sm:$0xff]
    %v157 = vld [vmem:[#allocation2 + $0x50] sm:$0xff]
    %v158 = vld [vmem:[#allocation2 + $0x58] sm:$0xff]
    %v159 = vld [vmem:[#allocation2 + $0x60] sm:$0xff]
    %v160 = vld [vmem:[#allocation2 + $0x68] sm:$0xff]
    %v161 = vld [vmem:[#allocation2 + $0x70] sm:$0xff]
    %v162 = vld [vmem:[#allocation2 + $0x78] sm:$0xff]
    %v163 = vld [vmem:[#allocation4] sm:$0xff]
    %v164 = vld [vmem:[#allocation4 + $0x8] sm:$0xff]
    %v165 = vld [vmem:[#allocation4 + $0x10] sm:$0xff]
    %v166 = vld [vmem:[#allocation4 + $0x18] sm:$0xff]
    %v167 = vld [vmem:[#allocation4 + $0x20] sm:$0xff]
    %v168 = vld [vmem:[#allocation4 + $0x28] sm:$0xff]
    %v169 = vld [vmem:[#allocation4 + $0x30] sm:$0xff]
    %v170 = vld [vmem:[#allocation4 + $0x38] sm:$0xff]
    %v171 = vld [vmem:[#allocation4 + $0x40] sm:$0xff]
    %v172 = vld [vmem:[#allocation4 + $0x48] sm:$0xff]
    %v173 = vld [vmem:[#allocation4 + $0x50] sm:$0xff]
    %v174 = vld [vmem:[#allocation4 + $0x58] sm:$0xff]
    %v175 = vld [vmem:[#allocation4 + $0x60] sm:$0xff]
    %v176 = vld [vmem:[#allocation4 + $0x68] sm:$0xff]
    %v177 = vld [vmem:[#allocation4 + $0x70] sm:$0xff]
    %v178 = vld [vmem:[#allocation4 + $0x78] sm:$0xff]
    %179 = vmatpush.msra.mxu0 %v178
    %180 = vmatpush.msra.mxu0 %v177
    %181 = vmatpush.msra.mxu0 %v176
    %182 = vmatpush.msra.mxu0 %v175
    %183 = vmatpush.msra.mxu0 %v174
    %184 = vmatpush.msra.mxu0 %v173
    %185 = vmatpush.msra.mxu0 %v172
    %186 = vmatpush.msra.mxu0 %v171
    %187 = vmatpush.msra.mxu0 %v170
    %188 = vmatpush.msra.mxu0 %v169
    %189 = vmatpush.msra.mxu0 %v168
    %190 = vmatpush.msra.mxu0 %v167
    %191 = vmatpush.msra.mxu0 %v166
    %192 = vmatpush.msra.mxu0 %v165
    %193 = vmatpush.msra.mxu0 %v164
    %194 = vmatpush.msra.mxu0 %v163
    %195 = vmatmul.f32.gmra.mxu0 %v145
    %v196 = vpop.f32.mrf.mxu0
    %v197 = vadd.f32 0.0, %v196
    %198 = vdwg.mxu0
    %199 = vmatpush.msra.mxu0 %v162
    %200 = vmatpush.msra.mxu0 %v161
    %201 = vmatpush.msra.mxu0 %v160
    %202 = vmatpush.msra.mxu0 %v159
    %203 = vmatpush.msra.mxu0 %v158
    %204 = vmatpush.msra.mxu0 %v157
    %205 = vmatpush.msra.mxu0 %v156
    %206 = vmatpush.msra.mxu0 %v155
    %207 = vmatpush.msra.mxu0 %v154
    %208 = vmatpush.msra.mxu0 %v153
    %209 = vmatpush.msra.mxu0 %v152
    %210 = vmatpush.msra.mxu0 %v151
    %211 = vmatpush.msra.mxu0 %v150
    %212 = vmatpush.msra.mxu0 %v149
    %213 = vmatpush.msra.mxu0 %v148
    %214 = vmatpush.msra.mxu0 %v147
    %215 = vmatmul.f32.gmra.mxu0 %v122
    %v216 = vpop.f32.mrf.mxu0
    %v217 = vadd.f32 %v197, %v216
    %218 = vdwg.mxu0
    %v219 = vld [vmem:[%s5] sm:$0x1]
    %v221 = vperm.slane %v219, 0
    %v223 = vadd.f32 %v217, %v221
    %vm224 = vcmp.ge.f32.partialorder %v223, 0.0
    %v225 = vmul.f32 %v223, 0.01
    %v226 = vsel %vm224, %v223, %v225
    %v227 = vld [vmem:[%s6] sm:$0x1]
    %v229 = vperm.slane %v227, 0
    %v231 = vmul.f32 %v226, %v229
    %v232 = vld [vmem:[%s7] sm:$0x1]
    %v234 = vperm.slane %v232, 0
    %v236 = vadd.f32 %v231, %v234
    %v237 = vld [vmem:[#allocation6] sm:$0xff]
    %v238 = vld [vmem:[#allocation6 + $0x8] sm:$0xff]
    %v239 = vld [vmem:[#allocation6 + $0x10] sm:$0xff]
    %v240 = vld [vmem:[#allocation6 + $0x18] sm:$0xff]
    %v241 = vld [vmem:[#allocation6 + $0x20] sm:$0xff]
    %v242 = vld [vmem:[#allocation6 + $0x28] sm:$0xff]
    %v243 = vld [vmem:[#allocation6 + $0x30] sm:$0xff]
    %v244 = vld [vmem:[#allocation6 + $0x38] sm:$0xff]
    %v245 = vld [vmem:[#allocation6 + $0x40] sm:$0xff]
    %v246 = vld [vmem:[#allocation6 + $0x48] sm:$0xff]
    %v247 = vld [vmem:[#allocation6 + $0x50] sm:$0xff]
    %v248 = vld [vmem:[#allocation6 + $0x58] sm:$0xff]
    %v249 = vld [vmem:[#allocation6 + $0x60] sm:$0xff]
    %v250 = vld [vmem:[#allocation6 + $0x68] sm:$0xff]
    %v251 = vld [vmem:[#allocation6 + $0x70] sm:$0xff]
    %v252 = vld [vmem:[#allocation6 + $0x78] sm:$0xff]
    %v253 = vld [vmem:[#allocation6 + $0x80] sm:$0xff]
    %v254 = vld [vmem:[#allocation6 + $0x88] sm:$0xff]
    %v255 = vld [vmem:[#allocation6 + $0x90] sm:$0xff]
    %v256 = vld [vmem:[#allocation6 + $0x98] sm:$0xff]
    %v257 = vld [vmem:[#allocation6 + $0xa0] sm:$0xff]
    %v258 = vld [vmem:[#allocation6 + $0xa8] sm:$0xff]
    %v259 = vld [vmem:[#allocation6 + $0xb0] sm:$0xff]
    %v260 = vld [vmem:[#allocation6 + $0xb8] sm:$0xff]
    %v261 = vld [vmem:[#allocation6 + $0xc0] sm:$0xff]
    %v262 = vld [vmem:[#allocation6 + $0xc8] sm:$0xff]
    %v263 = vld [vmem:[#allocation6 + $0xd0] sm:$0xff]
    %v264 = vld [vmem:[#allocation6 + $0xd8] sm:$0xff]
    %v265 = vld [vmem:[#allocation6 + $0xe0] sm:$0xff]
    %v266 = vld [vmem:[#allocation6 + $0xe8] sm:$0xff]
    %v267 = vld [vmem:[#allocation6 + $0xf0] sm:$0xff]
    %v268 = vld [vmem:[#allocation6 + $0xf8] sm:$0xff]
    %v269 = vld [vmem:[%s9] sm:$0x3]
    %v271 = vperm.slane %v269, 0
    %v272 = vperm.slane %v269, 1
    %275 = vmatpush.msra.mxu0 %v267
    %276 = vmatpush.msra.mxu0 %v265
    %277 = vmatpush.msra.mxu0 %v263
    %278 = vmatpush.msra.mxu0 %v261
    %279 = vmatpush.msra.mxu0 %v259
    %280 = vmatpush.msra.mxu0 %v257
    %281 = vmatpush.msra.mxu0 %v255
    %282 = vmatpush.msra.mxu0 %v253
    %283 = vmatpush.msra.mxu0 %v251
    %284 = vmatpush.msra.mxu0 %v249
    %285 = vmatpush.msra.mxu0 %v247
    %286 = vmatpush.msra.mxu0 %v245
    %287 = vmatpush.msra.mxu0 %v243
    %288 = vmatpush.msra.mxu0 %v241
    %289 = vmatpush.msra.mxu0 %v239
    %290 = vmatpush.msra.mxu0 %v237
    %291 = vmatmul.f32.gmra.mxu0 %v236
    %v292 = vpop.f32.mrf.mxu0
    %v293 = vadd.f32 %v271, %v292
    %294 = vdwg.mxu0
    %295 = vmatpush.msra.mxu0 %v268
    %296 = vmatpush.msra.mxu0 %v266
    %297 = vmatpush.msra.mxu0 %v264
    %298 = vmatpush.msra.mxu0 %v262
    %299 = vmatpush.msra.mxu0 %v260
    %300 = vmatpush.msra.mxu0 %v258
    %301 = vmatpush.msra.mxu0 %v256
    %302 = vmatpush.msra.mxu0 %v254
    %303 = vmatpush.msra.mxu0 %v252
    %304 = vmatpush.msra.mxu0 %v250
    %305 = vmatpush.msra.mxu0 %v248
    %306 = vmatpush.msra.mxu0 %v246
    %307 = vmatpush.msra.mxu0 %v244
    %308 = vmatpush.msra.mxu0 %v242
    %309 = vmatpush.msra.mxu0 %v240
    %310 = vmatpush.msra.mxu0 %v238
    %311 = vmatmul.f32.gmra.mxu0 %v236
    %v312 = vpop.f32.mrf.mxu0
    %v313 = vadd.f32 %v272, %v312
    %314 = vdwg.mxu0
    %315 = vst [vmem:[%s10] sm:$0xff] %v293
    %316 = vst [vmem:[%s10 + $0x8] sm:$0xff] %v313
    // Predicated region
    $region54: #{bgconv_unit_forward.2} parent=1 // pred_check
      _
    $region55: #{bgconv_unit_forward.2} parent=1 // pred_check_branch
      %318 = sbr.rel (0) target = $region57
    $region56: #{bgconv_unit_forward.2} parent=1 // pred_region
      _
    $region57: #{bgconv_unit_forward.2} parent=1 // pred_fallthru
      _
    // Predicated region
    $region58: #{bgconv_unit_forward.2} parent=1 // pred_check
      _
    $region59: #{bgconv_unit_forward.2} parent=1 // pred_check_branch
      %320 = sbr.rel (0) target = $region61
    $region60: #{bgconv_unit_forward.2} parent=1 // pred_region
      _
    $region61: #{bgconv_unit_forward.2} parent=1 // pred_fallthru
      _
    %321 = vsyncpa [#allocation3], 1
    %322 = vsyncpa [#allocation5], 1

</llo_original>
